<compile_context>
chip_gen: v5e
topology: v5e:2x2
jax: 0.10.0
libtpu: 0.0.40
codegen_flags: <defaults>
</compile_context>

<pallas_src>
import functools

import jax
import jax.numpy as jnp
from jax import lax
from jax.experimental import pallas as pl
from jax.experimental.pallas import tpu as pltpu


def _round_up(x, m):
    return ((x + m - 1) // m) * m


def _char_cnn_kernel(ids_ref, w_ref, tout_ref, bias_ref, out_ref, *, char_len):
    """Fused char_CNN forward for one block of words.

    ids_ref  : (wpb*char_len, 1) int32   flattened char ids of this word block
    w_ref    : (V_pad, max_h*F_pad) bf16 embedding-folded conv weights
    tout_ref : (1, F_pad) int32          valid conv length per output column
    bias_ref : (1, F_pad) f32            per-column bias (0 on padding lanes)
    out_ref  : (wpb, F_pad) f32          pooled + ReLU output (lane-dense)
    """
    rows = ids_ref.shape[0]                      # wpb * char_len
    wpb, f_pad = out_ref.shape
    v_pad = w_ref.shape[0]
    max_h = w_ref.shape[1] // f_pad

    # ---- embedding gather + ALL conv offsets as ONE bf16 MXU matmul --------
    ids = ids_ref[...]                                           # (rows, 1)
    vocab_iota = lax.broadcasted_iota(jnp.int32, (rows, v_pad), 1)
    onehot = (vocab_iota == ids).astype(jnp.bfloat16)            # exact 0/1
    s = jnp.dot(onehot, w_ref[...],
                preferred_element_type=jnp.float32)              # (rows, max_h*F_pad)

    # ---- shift-and-add over kernel-height offsets via sublane rolls --------
    # acc[r, c] = sum_dh s[(r+dh) % rows, dh*F_pad + c]; zero-padded weight
    # rows (dh >= layer height) contribute exactly 0, so wrap-around is
    # harmless and valid positions never cross a word boundary.
    acc = s[:, :f_pad]
    for dh in range(1, max_h):
        part = s[:, dh * f_pad:(dh + 1) * f_pad]                 # 128-lane aligned
        acc = acc + pltpu.roll(part, shift=rows - dh, axis=0)    # == roll by -dh

    # ---- mask invalid conv positions, per-word max-pool, bias, ReLU --------
    pos = lax.broadcasted_iota(jnp.int32, (rows, 1), 0) % char_len
    acc = jnp.where(pos < tout_ref[...], acc, -1e30)

    # char_len is a multiple of 8 here, so this reshape keeps the (8,128)
    # tiling intact (no relayout); the reduce runs on the XLU.
    pooled = jnp.max(acc.reshape(wpb, char_len, f_pad), axis=1)  # (wpb, F_pad)
    out_ref[...] = jnp.maximum(pooled + bias_ref[...], 0.0).astype(out_ref.dtype)


def _fold_params(params, conv_conf, char_len):
    """Fold the embedding table into the conv weights and pack all (dh, layer)
    groups into one lane-dense weight matrix + per-column t_out / bias rows."""
    emb = params["emb"].astype(jnp.float32)                      # (V, c_dim)
    V = emb.shape[0]
    heights = [l["height"] for l in conv_conf]
    filters = [l["filters"] for l in conv_conf]
    max_h = max(heights)
    sum_f = sum(filters)
    f_pad = _round_up(sum_f, 128)        # lane-dense output / per-dh group
    v_pad = _round_up(V, 128)            # lane-dense one-hot (free: lanes are 128 anyway)

    w_all = jnp.zeros((v_pad, max_h * f_pad), jnp.float32)
    t_out = jnp.full((1, f_pad), char_len, jnp.int32)            # pad cols stay 0 -> ReLU 0
    bias = jnp.zeros((1, f_pad), jnp.float32)

    off = 0
    for l, _layer in enumerate(conv_conf):
        w = params[f"conv{l}_w"].astype(jnp.float32)             # (F, 1, h, c_dim)
        b = params[f"conv{l}_b"].astype(jnp.float32)             # (F,)
        F_l, _, h_l, _ = w.shape
        for dh in range(h_l):
            fold = emb @ w[:, 0, dh, :].T                        # (V, F_l)
            c0 = dh * f_pad + off
            w_all = w_all.at[:V, c0:c0 + F_l].set(fold)
        t_out = t_out.at[0, off:off + F_l].set(char_len - h_l + 1)
        bias = bias.at[0, off:off + F_l].set(b)
        off += F_l

    return w_all.astype(jnp.bfloat16), t_out, bias, max_h, sum_f, f_pad, v_pad


def char_cnn_forward(char_ids, params, conv_conf, *, words_per_block=256):
    """char_CNN.forward: (B, SEQ, CHAR_LEN) int32 -> (B, SEQ, sum_filters) f32.

    words_per_block sizes the grid block (per-chip guidance: ~256-512 on
    v5e / v7x, 1024+ on v6e; raise vmem_limit_bytes accordingly for very
    large blocks)."""
    B, SEQ, CL = char_ids.shape
    n_words = B * SEQ

    w_all, t_out, bias, max_h, sum_f, f_pad, v_pad = _fold_params(
        params, conv_conf, CL)

    # Pick a block of words that divides n_words; the ids block must stay a
    # whole number of words (and a multiple of 8 rows) so shift/pool never
    # straddle a word or block boundary.
    wpb = max(1, min(words_per_block, n_words))
    while n_words % wpb:
        wpb -= 1
    if (wpb * CL) % 8 != 0:
        wpb = n_words                      # fall back to one whole-array block

    rows_pb = wpb * CL
    grid = (n_words // wpb,)

    ids_flat = char_ids.reshape(n_words * CL, 1).astype(jnp.int32)

    kernel = functools.partial(_char_cnn_kernel, char_len=CL)

    out = pl.pallas_call(
        kernel,
        out_shape=jax.ShapeDtypeStruct((n_words, f_pad), jnp.float32),
        grid=grid,
        in_specs=[
            pl.BlockSpec((rows_pb, 1), lambda i: (i, 0)),              # ids (tiled)
            pl.BlockSpec((v_pad, max_h * f_pad), lambda i: (0, 0)),    # folded weights
            pl.BlockSpec((1, f_pad), lambda i: (0, 0)),                # per-col t_out
            pl.BlockSpec((1, f_pad), lambda i: (0, 0)),                # per-col bias
        ],
        out_specs=pl.BlockSpec((wpb, f_pad), lambda i: (i, 0)),
        compiler_params=pltpu.CompilerParams(
            dimension_semantics=("parallel",),        # v7x: shard blocks over 2 TCs
            vmem_limit_bytes=32 * 1024 * 1024,
        ),
    )(ids_flat, w_all, t_out, bias)

    # Strip lane padding and restore (B, SEQ, sum_filters).
    return out[:, :sum_f].reshape(B, SEQ, sum_f)


def char_cnn_ref(char_ids, params, conv_conf):
    """Pure-JAX reference mirroring the PyTorch module (eval mode)."""
    B, SEQ, CL = char_ids.shape
    emb = params["emb"]
    x = emb[char_ids]                                   # (B, SEQ, CL, c_dim)
    xf = x.reshape(B * SEQ, CL, -1)
    outs = []
    for l, _layer in enumerate(conv_conf):
        w = params[f"conv{l}_w"]                        # (F, 1, h, c_dim)
        b = params[f"conv{l}_b"]                        # (F,)
        F_l, _, h, _ = w.shape
        t_out = CL - h + 1
        conv = jnp.zeros((B * SEQ, t_out, F_l), jnp.float32)
        for dh in range(h):
            conv = conv + jnp.einsum("ntd,fd->ntf",
                                     xf[:, dh:dh + t_out, :], w[:, 0, dh, :])
        conv = conv + b[None, None, :]
        outs.append(jnp.max(conv, axis=1))
    out = jnp.maximum(jnp.concatenate(outs, axis=-1), 0.0)
    return out.reshape(B, SEQ, -1)


if __name__ == "__main__":
    # Small shapes consistent with the module:
    #   conf ~ {'c_dim': 16, 'c_in_dropout': 0.1,
    #           'c_cnn_layers': [{'height': 2, 'filters': 16},
    #                            {'height': 3, 'filters': 16}]}
    B, SEQ, CHAR_LEN = 2, 8, 16
    VOCAB, C_DIM = 48, 16
    conv_conf = [{"height": 2, "filters": 16}, {"height": 3, "filters": 16}]

    key = jax.random.PRNGKey(0)
    k_ids, k_emb, k_w0, k_b0, k_w1, k_b1 = jax.random.split(key, 6)

    char_ids = jax.random.randint(k_ids, (B, SEQ, CHAR_LEN), 0, VOCAB,
                                  dtype=jnp.int32)

    params = {
        "emb": jax.random.normal(k_emb, (VOCAB, C_DIM), jnp.float32),
        "conv0_w": jax.random.normal(k_w0, (16, 1, 2, C_DIM), jnp.float32) * 0.1,
        "conv0_b": jax.random.normal(k_b0, (16,), jnp.float32) * 0.1,
        "conv1_w": jax.random.normal(k_w1, (16, 1, 3, C_DIM), jnp.float32) * 0.1,
        "conv1_b": jax.random.normal(k_b1, (16,), jnp.float32) * 0.1,
    }

    # words_per_block=8 -> grid of 2 word blocks (exercises the BlockSpec grid).
    out = char_cnn_forward(char_ids, params, conv_conf, words_per_block=8)
    jax.block_until_ready(out)

    assert out.shape == (B, SEQ, sum(l["filters"] for l in conv_conf))
    assert bool(jnp.all(jnp.isfinite(out)))

    ref = char_cnn_ref(char_ids, params, conv_conf)
    max_err = float(jnp.max(jnp.abs(out - ref)))
    assert max_err < 5e-2, f"mismatch vs pure-JAX reference: {max_err}"

    print("KERNEL_OK")
</pallas_src>

<mosaic_0001>
module attributes {stable_mosaic.version = 11 : i64} {
  func.func @_char_cnn_kernel(%arg0: i32, %arg1: memref<128x1xi32, #tpu.memory_space<vmem>>, %arg2: memref<128x384xbf16, #tpu.memory_space<vmem>>, %arg3: memref<1x128xi32, #tpu.memory_space<vmem>>, %arg4: memref<1x128xf32, #tpu.memory_space<vmem>>, %arg5: memref<8x128xf32, #tpu.memory_space<vmem>>) attributes {dimension_semantics = [#tpu.dimension_semantics<parallel>], iteration_bounds = array<i64: 2>, scalar_prefetch = 0 : i64, scratch_operands = 0 : i64, tpu.core_type = #tpu.core_type<tc>, window_params = [{transform_indices = @transform_0, window_bounds = array<i64: 128, 1>}, {pipeline_mode = #tpu.pipeline_mode<synchronous>, transform_indices = @transform_1, window_bounds = array<i64: 128, 384>}, {pipeline_mode = #tpu.pipeline_mode<synchronous>, transform_indices = @transform_2, window_bounds = array<i64: 1, 128>}, {pipeline_mode = #tpu.pipeline_mode<synchronous>, transform_indices = @transform_3, window_bounds = array<i64: 1, 128>}, {transform_indices = @transform_4, window_bounds = array<i64: 8, 128>}]} {
    %c0 = arith.constant 0 : index
    %c0_0 = arith.constant 0 : index
    %0 = vector.load %arg1[%c0, %c0_0] : memref<128x1xi32, #tpu.memory_space<vmem>>, vector<128x1xi32>
    %1 = tpu.iota {dimensions = array<i32: 1>} : vector<128x128xi32>
    %2 = vector.broadcast %0 : vector<128x1xi32> to vector<128x128xi32>
    %3 = arith.cmpi eq, %1, %2 : vector<128x128xi32>
    %4 = arith.extui %3 : vector<128x128xi1> to vector<128x128xi32>
    %5 = arith.sitofp %4 : vector<128x128xi32> to vector<128x128xf32>
    %6 = arith.truncf %5 : vector<128x128xf32> to vector<128x128xbf16>
    %c0_1 = arith.constant 0 : index
    %c0_2 = arith.constant 0 : index
    %7 = vector.load %arg2[%c0_1, %c0_2] : memref<128x384xbf16, #tpu.memory_space<vmem>>, vector<128x384xbf16>
    %cst = arith.constant dense<0.000000e+00> : vector<128x384xf32>
    %8 = tpu.matmul %6, %7, %cst {dimension_numbers = #tpu.dot_dimension_numbers<[1], [0], [0], [1], [0, 0, 1, 1], [], []>} : vector<128x128xbf16>, vector<128x384xbf16>, vector<128x384xf32> -> vector<128x384xf32>
    %9 = vector.extract_strided_slice %8 {offsets = [0, 0], sizes = [128, 128], strides = [1, 1]} : vector<128x384xf32> to vector<128x128xf32>
    %10 = vector.extract_strided_slice %8 {offsets = [0, 128], sizes = [128, 128], strides = [1, 1]} : vector<128x384xf32> to vector<128x128xf32>
    %c127_i32 = arith.constant 127 : i32
    %11 = tpu.dynamic_rotate %10 by %c127_i32 dim 0 : vector<128x128xf32>, i32 -> vector<128x128xf32>
    %12 = arith.addf %9, %11 : vector<128x128xf32>
    %13 = vector.extract_strided_slice %8 {offsets = [0, 256], sizes = [128, 128], strides = [1, 1]} : vector<128x384xf32> to vector<128x128xf32>
    %c126_i32 = arith.constant 126 : i32
    %14 = tpu.dynamic_rotate %13 by %c126_i32 dim 0 : vector<128x128xf32>, i32 -> vector<128x128xf32>
    %15 = arith.addf %12, %14 : vector<128x128xf32>
    %16 = tpu.iota {dimensions = array<i32: 0>} : vector<128x1xi32>
    %c16_i32 = arith.constant 16 : i32
    %c0_i32 = arith.constant 0 : i32
    %17 = arith.cmpi eq, %c16_i32, %c0_i32 : i32
    %c1_i32 = arith.constant 1 : i32
    %18 = arith.select %17, %c1_i32, %c16_i32 : i32
    %19 = vector.broadcast %18 : i32 to vector<128x1xi32>
    %20 = arith.remsi %16, %19 : vector<128x1xi32>
    %c0_i32_3 = arith.constant 0 : i32
    %21 = vector.broadcast %c0_i32_3 : i32 to vector<128x1xi32>
    %22 = arith.cmpi ne, %20, %21 : vector<128x1xi32>
    %c0_i32_4 = arith.constant 0 : i32
    %23 = vector.broadcast %c0_i32_4 : i32 to vector<128x1xi32>
    %24 = arith.cmpi slt, %20, %23 : vector<128x1xi32>
    %c0_i32_5 = arith.constant 0 : i32
    %25 = arith.cmpi slt, %18, %c0_i32_5 : i32
    %26 = vector.broadcast %25 : i1 to vector<128x1xi1>
    %27 = vector.broadcast %26 : vector<128x1xi1> to vector<128x1xi1>
    %28 = arith.xori %24, %27 : vector<128x1xi1>
    %29 = arith.andi %28, %22 : vector<128x1xi1>
    %30 = vector.broadcast %18 : i32 to vector<128x1xi32>
    %31 = arith.addi %20, %30 : vector<128x1xi32>
    %32 = arith.select %29, %31, %20 : vector<128x1xi1>, vector<128x1xi32>
    %c0_6 = arith.constant 0 : index
    %c0_7 = arith.constant 0 : index
    %33 = vector.load %arg3[%c0_6, %c0_7] : memref<1x128xi32, #tpu.memory_space<vmem>>, vector<1x128xi32>
    %34 = vector.broadcast %32 : vector<128x1xi32> to vector<128x128xi32>
    %35 = vector.broadcast %33 : vector<1x128xi32> to vector<128x128xi32>
    %36 = arith.cmpi slt, %34, %35 : vector<128x128xi32>
    %cst_8 = arith.constant -1.000000e+30 : f32
    %37 = vector.broadcast %cst_8 : f32 to vector<128x128xf32>
    %38 = arith.select %36, %15, %37 : vector<128x128xi1>, vector<128x128xf32>
    %39 = vector.shape_cast %38 : vector<128x128xf32> to vector<8x16x128xf32>
    %cst_9 = arith.constant dense<0xFF800000> : vector<8x128xf32>
    %40 = vector.multi_reduction <maximumf>, %39, %cst_9 [1] : vector<8x16x128xf32> to vector<8x128xf32>
    %c0_10 = arith.constant 0 : index
    %c0_11 = arith.constant 0 : index
    %41 = vector.load %arg4[%c0_10, %c0_11] : memref<1x128xf32, #tpu.memory_space<vmem>>, vector<1x128xf32>
    %42 = vector.broadcast %41 : vector<1x128xf32> to vector<8x128xf32>
    %43 = arith.addf %40, %42 : vector<8x128xf32>
    %cst_12 = arith.constant 0.000000e+00 : f32
    %44 = vector.broadcast %cst_12 : f32 to vector<8x128xf32>
    %45 = arith.maximumf %43, %44 : vector<8x128xf32>
    %c0_13 = arith.constant 0 : index
    %c0_14 = arith.constant 0 : index
    %46 = vector.load %arg5[%c0_13, %c0_14] : memref<8x128xf32, #tpu.memory_space<vmem>>, vector<8x128xf32>
    tpu.vector_store %arg5[%c0_13, %c0_14], %45 {strides = array<i32>} : memref<8x128xf32, #tpu.memory_space<vmem>>, vector<8x128xf32>,
    return
  }
  func.func @transform_0(%arg0: i32) -> (i32, i32) {
    %c0_i32 = arith.constant 0 : i32
    %c0_i32_0 = arith.constant 0 : i32
    return %arg0, %c0_i32 : i32, i32
  }
  func.func @transform_1(%arg0: i32) -> (i32, i32) {
    %c0_i32 = arith.constant 0 : i32
    %c0_i32_0 = arith.constant 0 : i32
    %c0_i32_1 = arith.constant 0 : i32
    return %c0_i32, %c0_i32_0 : i32, i32
  }
  func.func @transform_2(%arg0: i32) -> (i32, i32) {
    %c0_i32 = arith.constant 0 : i32
    %c0_i32_0 = arith.constant 0 : i32
    %c0_i32_1 = arith.constant 0 : i32
    return %c0_i32, %c0_i32_0 : i32, i32
  }
  func.func @transform_3(%arg0: i32) -> (i32, i32) {
    %c0_i32 = arith.constant 0 : i32
    %c0_i32_0 = arith.constant 0 : i32
    %c0_i32_1 = arith.constant 0 : i32
    return %c0_i32, %c0_i32_0 : i32, i32
  }
  func.func @transform_4(%arg0: i32) -> (i32, i32) {
    %c0_i32 = arith.constant 0 : i32
    %c0_i32_0 = arith.constant 0 : i32
    return %arg0, %c0_i32 : i32, i32
  }
}

</mosaic_0001>

<llo_original>
// kernel: tpu_custom_call.1
$region0: #{tpu_custom_call.1}
  #allocation0 [shape = 'u32[]', space=smem, size = 0x4, offset = 0x4, fixed_abs, tag = 'smem constant byte address 0x4 - core index']
  #allocation1 [shape = 'u32[72,128]{1,0:T(1,128)}', space=vmem, size = 0x9000, scoped, tag = 'internal scratch']
  %s0 = inlined_call_operand.vmem [shape: s32[256,1], index: 0, kind: input, shape index: {}]
  %s1 = inlined_call_operand.vmem [shape: bf16[128,384], index: 1, kind: input, shape index: {}]
  %s2 = inlined_call_operand.vmem [shape: s32[1,128], index: 2, kind: input, shape index: {}]
  %s3 = inlined_call_operand.vmem [shape: f32[1,128], index: 3, kind: input, shape index: {}]
  %s4 = inlined_call_operand.hbm [shape: f32[16,128], index: 4, kind: output, shape index: {}]
  %s5 = sld [smem:[#allocation0]]
  $region49: #{tpu_custom_call.1} parent=0
    _
  %s7 = ssub.s32 1, %s5
  %s8 = scalar_select 0, %s7, %s5
  $region1: #{tpu_custom_call.1} parent=0
    #allocation2 [shape = 'u8[8192]{0}', space=vmem, size = 0x2000, scoped, tag = 'output window, operand 0']
    #allocation3 [shape = 's32[2]{0}', space=sflag, size = 0x8, scoped, tag = 'scoped memory for tpu_custom_call.1']
    %9 = vsyncpa [#allocation3], 0
    %s10 = scalar_lea.sflag [#allocation3], 1
    %11 = vsyncpa %s10, 0
    loop: start=0, step=1, limit=4
    $region2: #{tpu_custom_call.1} parent=1 // loop_pre_header
      _
    $region3: #{tpu_custom_call.1} parent=1 // loop_header
      %s13 = sphi 0, %s17
      %p14 = scmp.ge.s32.totalorder %s13, 4
      %s23 = sphi 0, %s25
      %s26 = sphi 0, %s23
      %s27 = sphi 0, %s26
      %s43 = sphi 0, %s27
      %s47 = sphi 0, %s47
      %s49 = sphi 0, %s47
      %s50 = sphi 0, %s49
      %s64 = sphi 0, %s50
      %s68 = sphi 0, %s68
      %s70 = sphi 0, %s68
      %s71 = sphi 0, %s70
      %s85 = sphi 0, %s71
      %s89 = sphi 0, %s89
      %s91 = sphi 0, %s89
      %s92 = sphi 0, %s91
      %s106 = sphi 0, %s92
      %s112 = sphi 0, %s114
      %s115 = sphi 0, %s112
      %s116 = sphi 0, %s115
      %s132 = sphi 0, %s116
    $region4: #{tpu_custom_call.1} parent=1 // loop_header_branch
      %16 = sbr.rel (%p14) target = $region8
    $region5: #{tpu_custom_call.1} parent=1 // loop_body
      %s18 = ssub.s32 %s13, 1
      %s19 = ssub.s32 %s13, 2
      %s20 = sadd.s32 %s13, 1
      %s21 = ssub.s32 %s13, %s20
      %p22 = scmp.eq.s32.totalorder %s21, 0
      %s24 = sadd.s32 %s23, 1
      %s25 = scalar_select %p22, %s23, %s24
      %p28 = pneg %p22
      %p29 = scmp.eq.s32.totalorder %s13, 1
      %p30 = por %p28, %p29
      %p31 = scmp.ne.s32.totalorder %s23, %s26
      %p32 = scmp.eq.s32.totalorder %s13, 0
      %p33 = por %p31, %p32
      %p34 = scmp.ne.s32.totalorder %s23, %s26
      %p35 = scmp.eq.s32.totalorder %s18, 1
      %p36 = por %p34, %p35
      %p37 = scmp.ne.s32.totalorder %s26, %s27
      %p38 = scmp.eq.s32.totalorder %s18, 0
      %p39 = por %p37, %p38
      %p40 = scmp.ne.s32.totalorder %s26, %s27
      %p41 = scmp.eq.s32.totalorder %s19, 1
      %p42 = por %p40, %p41
      %p44 = scmp.ne.s32.totalorder %s27, %s43
      %p45 = scmp.eq.s32.totalorder %s19, 0
      %p46 = por %p44, %p45
      %s48 = sadd.s32 %s47, 1
      %p51 = scmp.eq.s32.totalorder %s13, 1
      %p52 = scmp.ne.s32.totalorder %s47, %s49
      %p53 = scmp.eq.s32.totalorder %s13, 0
      %p54 = por %p52, %p53
      %p55 = scmp.ne.s32.totalorder %s47, %s49
      %p56 = scmp.eq.s32.totalorder %s18, 1
      %p57 = por %p55, %p56
      %p58 = scmp.ne.s32.totalorder %s49, %s50
      %p59 = scmp.eq.s32.totalorder %s18, 0
      %p60 = por %p58, %p59
      %p61 = scmp.ne.s32.totalorder %s49, %s50
      %p62 = scmp.eq.s32.totalorder %s19, 1
      %p63 = por %p61, %p62
      %p65 = scmp.ne.s32.totalorder %s50, %s64
      %p66 = scmp.eq.s32.totalorder %s19, 0
      %p67 = por %p65, %p66
      %s69 = sadd.s32 %s68, 1
      %p72 = scmp.eq.s32.totalorder %s13, 1
      %p73 = scmp.ne.s32.totalorder %s68, %s70
      %p74 = scmp.eq.s32.totalorder %s13, 0
      %p75 = por %p73, %p74
      %p76 = scmp.ne.s32.totalorder %s68, %s70
      %p77 = scmp.eq.s32.totalorder %s18, 1
      %p78 = por %p76, %p77
      %p79 = scmp.ne.s32.totalorder %s70, %s71
      %p80 = scmp.eq.s32.totalorder %s18, 0
      %p81 = por %p79, %p80
      %p82 = scmp.ne.s32.totalorder %s70, %s71
      %p83 = scmp.eq.s32.totalorder %s19, 1
      %p84 = por %p82, %p83
      %p86 = scmp.ne.s32.totalorder %s71, %s85
      %p87 = scmp.eq.s32.totalorder %s19, 0
      %p88 = por %p86, %p87
      %s90 = sadd.s32 %s89, 1
      %p93 = scmp.eq.s32.totalorder %s13, 1
      %p94 = scmp.ne.s32.totalorder %s89, %s91
      %p95 = scmp.eq.s32.totalorder %s13, 0
      %p96 = por %p94, %p95
      %p97 = scmp.ne.s32.totalorder %s89, %s91
      %p98 = scmp.eq.s32.totalorder %s18, 1
      %p99 = por %p97, %p98
      %p100 = scmp.ne.s32.totalorder %s91, %s92
      %p101 = scmp.eq.s32.totalorder %s18, 0
      %p102 = por %p100, %p101
      %p103 = scmp.ne.s32.totalorder %s91, %s92
      %p104 = scmp.eq.s32.totalorder %s19, 1
      %p105 = por %p103, %p104
      %p107 = scmp.ne.s32.totalorder %s92, %s106
      %p108 = scmp.eq.s32.totalorder %s19, 0
      %p109 = por %p107, %p108
      %s110 = ssub.s32 %s13, %s20
      %p111 = scmp.eq.s32.totalorder %s110, 0
      %s113 = sadd.s32 %s112, 1
      %s114 = scalar_select %p111, %s112, %s113
      %p117 = pneg %p111
      %p118 = scmp.eq.s32.totalorder %s13, 1
      %p119 = por %p117, %p118
      %p120 = scmp.ne.s32.totalorder %s112, %s115
      %p121 = scmp.eq.s32.totalorder %s13, 0
      %p122 = por %p120, %p121
      %p123 = scmp.ne.s32.totalorder %s112, %s115
      %p124 = scmp.eq.s32.totalorder %s18, 1
      %p125 = por %p123, %p124
      %p126 = scmp.ne.s32.totalorder %s115, %s116
      %p127 = scmp.eq.s32.totalorder %s18, 0
      %p128 = por %p126, %p127
      %p129 = scmp.ne.s32.totalorder %s115, %s116
      %p130 = scmp.eq.s32.totalorder %s19, 1
      %p131 = por %p129, %p130
      %p133 = scmp.ne.s32.totalorder %s116, %s132
      %p134 = scmp.eq.s32.totalorder %s19, 0
      %p135 = por %p133, %p134
      %p136 = scmp.le.s32.totalorder 1, %s13
      %p137 = scmp.lt.s32.totalorder %s13, 3
      %p138 = pnand %p136, %p137
      %p139 = pneg %p138
      // Predicated region
      $region9: #{tpu_custom_call.1} parent=5 // pred_check
        _
      $region10: #{tpu_custom_call.1} parent=5 // pred_check_branch
        %141 = sbr.rel (%p138) target = $region12
      $region11: #{tpu_custom_call.1} parent=5 // pred_region
        %s142 = ssub.s32 %s13, 1
        // Predicated region
        $region13: #{tpu_custom_call.1} parent=11 // pred_check
          %p143 = pneg %p60
        $region14: #{tpu_custom_call.1} parent=11 // pred_check_branch
          %145 = sbr.rel (%p143) target = $region16
        $region15: #{tpu_custom_call.1} parent=11 // pred_region
          _
        $region16: #{tpu_custom_call.1} parent=11 // pred_fallthru
          _
        // Predicated region
        $region17: #{tpu_custom_call.1} parent=11 // pred_check
          %p146 = pneg %p81
        $region18: #{tpu_custom_call.1} parent=11 // pred_check_branch
          %148 = sbr.rel (%p146) target = $region20
        $region19: #{tpu_custom_call.1} parent=11 // pred_region
          _
        $region20: #{tpu_custom_call.1} parent=11 // pred_fallthru
          _
        // Predicated region
        $region21: #{tpu_custom_call.1} parent=11 // pred_check
          %p149 = pneg %p102
        $region22: #{tpu_custom_call.1} parent=11 // pred_check_branch
          %151 = sbr.rel (%p149) target = $region24
        $region23: #{tpu_custom_call.1} parent=11 // pred_region
          _
        $region24: #{tpu_custom_call.1} parent=11 // pred_fallthru
          _
      $region12: #{tpu_custom_call.1} parent=5 // pred_fallthru
        _
      %p152 = scmp.lt.s32.totalorder %s13, 2
      // Predicated region
      $region25: #{tpu_custom_call.1} parent=5 // pred_check
        %p153 = pneg %p152
      $region26: #{tpu_custom_call.1} parent=5 // pred_check_branch
        %155 = sbr.rel (%p153) target = $region28
      $region27: #{tpu_custom_call.1} parent=5 // pred_region
        // Predicated region
        $region29: #{tpu_custom_call.1} parent=27 // pred_check
          %p156 = pneg %p33
        $region30: #{tpu_custom_call.1} parent=27 // pred_check_branch
          %158 = sbr.rel (%p156) target = $region32
        $region31: #{tpu_custom_call.1} parent=27 // pred_region
          %s159 = smul.u32 16, %s13
          %p160 = scmp.lt.s32.totalorder %s159, 31
          %s161 = scalar_select %p160, %s159, 31
          %s162 = smul.addr %s161, 8
          %s163 = scalar_lea.vmem %s0, %s162
          %s164 = smul.u32 16, %s13
        $region32: #{tpu_custom_call.1} parent=27 // pred_fallthru
          _
      $region28: #{tpu_custom_call.1} parent=5 // pred_fallthru
        _
      %p165 = scmp.le.s32.totalorder 1, %s13
      %p166 = scmp.lt.s32.totalorder %s13, 3
      %p167 = pnand %p165, %p166
      %p168 = pneg %p167
      // Predicated region
      $region33: #{tpu_custom_call.1} parent=5 // pred_check
        _
      $region34: #{tpu_custom_call.1} parent=5 // pred_check_branch
        %170 = sbr.rel (%p167) target = $region36
      $region35: #{tpu_custom_call.1} parent=5 // pred_region
        %s171 = ssub.s32 %s13, 1
        %s172 = smul.u32 16, %s18
        %p173 = scmp.lt.s32.totalorder %s172, 31
        %s174 = scalar_select %p173, %s172, 31
        %s175 = smul.addr %s174, 8
        %s176 = scalar_lea.vmem %s0, %s175
        %p177 = pneg %p39
        %p178 = pneg %p36
        %p179 = pneg %p60
        %p180 = pneg %p57
        %p181 = pneg %p81
        %p182 = pneg %p78
        %p183 = pneg %p102
        %p184 = pneg %p99
        %p185 = pneg %p128
        %p186 = pneg %p125
        %s187 = sand.u32 %s115, 1
        %s188 = scalar_lea.sflag [#allocation3], %s187
        %s189 = sand.u32 %s115, 1
        %s190 = smul.addr %s189, 8
        %s191 = scalar_lea.vmem [#allocation2], %s190
        %s192 = smul.u32 16, %s18
        %p193 = scmp.lt.s32.totalorder %s192, 31
        %s194 = scalar_select %p193, %s192, 31
        %s195 = smul.addr %s194, 8
        %s196 = scalar_lea.vmem %s0, %s195
        %s197 = smul.u32 16, %s18
        %v198 = vld [vmem:[%s196] sm:$0xff]
        %v199 = vld [vmem:[%s196 + $0x8] sm:$0xff]
        %v200 = vld [vmem:[%s196 + $0x10] sm:$0xff]
        %v201 = vld [vmem:[%s196 + $0x18] sm:$0xff]
        %v202 = vld [vmem:[%s196 + $0x20] sm:$0xff]
        %v203 = vld [vmem:[%s196 + $0x28] sm:$0xff]
        %v204 = vld [vmem:[%s196 + $0x30] sm:$0xff]
        %v205 = vld [vmem:[%s196 + $0x38] sm:$0xff]
        %v206 = vld [vmem:[%s196 + $0x40] sm:$0xff]
        %v207 = vld [vmem:[%s196 + $0x48] sm:$0xff]
        %v208 = vld [vmem:[%s196 + $0x50] sm:$0xff]
        %v209 = vld [vmem:[%s196 + $0x58] sm:$0xff]
        %v210 = vld [vmem:[%s196 + $0x60] sm:$0xff]
        %v211 = vld [vmem:[%s196 + $0x68] sm:$0xff]
        %v212 = vld [vmem:[%s196 + $0x70] sm:$0xff]
        %v213 = vld [vmem:[%s196 + $0x78] sm:$0xff]
        %v214 = vlaneseq
        %v215 = vand.u32 %v214, 127
        %216 = vset.pattern.permute.xlu0 0
        %217 = vperm.xlu0 %216, %v198
        %v218 = vpop.permute.xlu0 %217
        %219 = vset.pattern.permute.xlu0 0
        %220 = vperm.xlu0 %219, %v199
        %v221 = vpop.permute.xlu0 %220
        %222 = vset.pattern.permute.xlu0 0
        %223 = vperm.xlu0 %222, %v200
        %v224 = vpop.permute.xlu0 %223
        %225 = vset.pattern.permute.xlu0 0
        %226 = vperm.xlu0 %225, %v201
        %v227 = vpop.permute.xlu0 %226
        %228 = vset.pattern.permute.xlu0 0
        %229 = vperm.xlu0 %228, %v202
        %v230 = vpop.permute.xlu0 %229
        %231 = vset.pattern.permute.xlu0 0
        %232 = vperm.xlu0 %231, %v203
        %v233 = vpop.permute.xlu0 %232
        %234 = vset.pattern.permute.xlu0 0
        %235 = vperm.xlu0 %234, %v204
        %v236 = vpop.permute.xlu0 %235
        %237 = vset.pattern.permute.xlu0 0
        %238 = vperm.xlu0 %237, %v205
        %v239 = vpop.permute.xlu0 %238
        %240 = vset.pattern.permute.xlu0 0
        %241 = vperm.xlu0 %240, %v206
        %v242 = vpop.permute.xlu0 %241
        %243 = vset.pattern.permute.xlu0 0
        %244 = vperm.xlu0 %243, %v207
        %v245 = vpop.permute.xlu0 %244
        %246 = vset.pattern.permute.xlu0 0
        %247 = vperm.xlu0 %246, %v208
        %v248 = vpop.permute.xlu0 %247
        %249 = vset.pattern.permute.xlu0 0
        %250 = vperm.xlu0 %249, %v209
        %v251 = vpop.permute.xlu0 %250
        %252 = vset.pattern.permute.xlu0 0
        %253 = vperm.xlu0 %252, %v210
        %v254 = vpop.permute.xlu0 %253
        %255 = vset.pattern.permute.xlu0 0
        %256 = vperm.xlu0 %255, %v211
        %v257 = vpop.permute.xlu0 %256
        %258 = vset.pattern.permute.xlu0 0
        %259 = vperm.xlu0 %258, %v212
        %v260 = vpop.permute.xlu0 %259
        %261 = vset.pattern.permute.xlu0 0
        %262 = vperm.xlu0 %261, %v213
        %v263 = vpop.permute.xlu0 %262
        %vm264 = vcmp.eq.s32.totalorder %v215, %v218
        %vm265 = vcmp.eq.s32.totalorder %v215, %v221
        %vm266 = vcmp.eq.s32.totalorder %v215, %v224
        %vm267 = vcmp.eq.s32.totalorder %v215, %v227
        %vm268 = vcmp.eq.s32.totalorder %v215, %v230
        %vm269 = vcmp.eq.s32.totalorder %v215, %v233
        %vm270 = vcmp.eq.s32.totalorder %v215, %v236
        %vm271 = vcmp.eq.s32.totalorder %v215, %v239
        %vm272 = vcmp.eq.s32.totalorder %v215, %v242
        %vm273 = vcmp.eq.s32.totalorder %v215, %v245
        %vm274 = vcmp.eq.s32.totalorder %v215, %v248
        %vm275 = vcmp.eq.s32.totalorder %v215, %v251
        %vm276 = vcmp.eq.s32.totalorder %v215, %v254
        %vm277 = vcmp.eq.s32.totalorder %v215, %v257
        %vm278 = vcmp.eq.s32.totalorder %v215, %v260
        %vm279 = vcmp.eq.s32.totalorder %v215, %v263
        %v280 = vsel %vm264, 1, 0
        %v281 = vsel %vm265, 1, 0
        %v282 = vsel %vm266, 1, 0
        %v283 = vsel %vm267, 1, 0
        %v284 = vsel %vm268, 1, 0
        %v285 = vsel %vm269, 1, 0
        %v286 = vsel %vm270, 1, 0
        %v287 = vsel %vm271, 1, 0
        %v288 = vsel %vm272, 1, 0
        %v289 = vsel %vm273, 1, 0
        %v290 = vsel %vm274, 1, 0
        %v291 = vsel %vm275, 1, 0
        %v292 = vsel %vm276, 1, 0
        %v293 = vsel %vm277, 1, 0
        %v294 = vsel %vm278, 1, 0
        %v295 = vsel %vm279, 1, 0
        %v296 = vcvt.s32.f32 %v280
        %v297 = vcvt.s32.f32 %v281
        %v298 = vcvt.s32.f32 %v282
        %v299 = vcvt.s32.f32 %v283
        %v300 = vcvt.s32.f32 %v284
        %v301 = vcvt.s32.f32 %v285
        %v302 = vcvt.s32.f32 %v286
        %v303 = vcvt.s32.f32 %v287
        %v304 = vcvt.s32.f32 %v288
        %v305 = vcvt.s32.f32 %v289
        %v306 = vcvt.s32.f32 %v290
        %v307 = vcvt.s32.f32 %v291
        %v308 = vcvt.s32.f32 %v292
        %v309 = vcvt.s32.f32 %v293
        %v310 = vcvt.s32.f32 %v294
        %v311 = vcvt.s32.f32 %v295
        %v312 = vpack.c.bf16 %v297, %v296
        %v313 = vpack.c.bf16 %v299, %v298
        %v314 = vpack.c.bf16 %v301, %v300
        %v315 = vpack.c.bf16 %v303, %v302
        %v316 = vpack.c.bf16 %v305, %v304
        %v317 = vpack.c.bf16 %v307, %v306
        %v318 = vpack.c.bf16 %v309, %v308
        %v319 = vpack.c.bf16 %v311, %v310
        %v320 = vld [vmem:[%s1] sm:$0xff]
        %v321 = vld [vmem:[%s1 + $0x8] sm:$0xf]
        %v322 = vld [vmem:[%s1 + $0xc] sm:$0xff]
        %v323 = vld [vmem:[%s1 + $0x14] sm:$0xf]
        %v324 = vld [vmem:[%s1 + $0x18] sm:$0xff]
        %v325 = vld [vmem:[%s1 + $0x20] sm:$0xf]
        %v326 = vld [vmem:[%s1 + $0x24] sm:$0xff]
        %v327 = vld [vmem:[%s1 + $0x2c] sm:$0xf]
        %v328 = vld [vmem:[%s1 + $0x30] sm:$0xff]
        %v329 = vld [vmem:[%s1 + $0x38] sm:$0xf]
        %v330 = vld [vmem:[%s1 + $0x3c] sm:$0xff]
        %v331 = vld [vmem:[%s1 + $0x44] sm:$0xf]
        %v332 = vld [vmem:[%s1 + $0x48] sm:$0xff]
        %v333 = vld [vmem:[%s1 + $0x50] sm:$0xf]
        %v334 = vld [vmem:[%s1 + $0x54] sm:$0xff]
        %v335 = vld [vmem:[%s1 + $0x5c] sm:$0xf]
        %v336 = vld [vmem:[%s1 + $0x60] sm:$0xff]
        %v337 = vld [vmem:[%s1 + $0x68] sm:$0xf]
        %v338 = vld [vmem:[%s1 + $0x6c] sm:$0xff]
        %v339 = vld [vmem:[%s1 + $0x74] sm:$0xf]
        %v340 = vld [vmem:[%s1 + $0x78] sm:$0xff]
        %v341 = vld [vmem:[%s1 + $0x80] sm:$0xf]
        %v342 = vld [vmem:[%s1 + $0x84] sm:$0xff]
        %v343 = vld [vmem:[%s1 + $0x8c] sm:$0xf]
        %v344 = vld [vmem:[%s1 + $0x90] sm:$0xff]
        %v345 = vld [vmem:[%s1 + $0x98] sm:$0xf]
        %v346 = vld [vmem:[%s1 + $0x9c] sm:$0xff]
        %v347 = vld [vmem:[%s1 + $0xa4] sm:$0xf]
        %v348 = vld [vmem:[%s1 + $0xa8] sm:$0xff]
        %v349 = vld [vmem:[%s1 + $0xb0] sm:$0xf]
        %v350 = vld [vmem:[%s1 + $0xb4] sm:$0xff]
        %v351 = vld [vmem:[%s1 + $0xbc] sm:$0xf]
        %v384 = vunpack.c.l.b16 %v320
        %v385 = vunpack.c.h.b16 %v320
        %v386 = vunpack.c.l.b16 %v321
        %v387 = vunpack.c.l.b16 %v322
        %v388 = vunpack.c.h.b16 %v322
        %v389 = vunpack.c.l.b16 %v323
        %v390 = vunpack.c.l.b16 %v324
        %v391 = vunpack.c.h.b16 %v324
        %v392 = vunpack.c.l.b16 %v325
        %v393 = vunpack.c.l.b16 %v326
        %v394 = vunpack.c.h.b16 %v326
        %v395 = vunpack.c.l.b16 %v327
        %v396 = vunpack.c.l.b16 %v328
        %v397 = vunpack.c.h.b16 %v328
        %v398 = vunpack.c.l.b16 %v329
        %v399 = vunpack.c.l.b16 %v330
        %v400 = vunpack.c.h.b16 %v330
        %v401 = vunpack.c.l.b16 %v331
        %v402 = vunpack.c.l.b16 %v332
        %v403 = vunpack.c.h.b16 %v332
        %v404 = vunpack.c.l.b16 %v333
        %v405 = vunpack.c.l.b16 %v334
        %v406 = vunpack.c.h.b16 %v334
        %v407 = vunpack.c.l.b16 %v335
        %v408 = vunpack.c.l.b16 %v336
        %v409 = vunpack.c.h.b16 %v336
        %v410 = vunpack.c.l.b16 %v337
        %v411 = vunpack.c.l.b16 %v338
        %v412 = vunpack.c.h.b16 %v338
        %v413 = vunpack.c.l.b16 %v339
        %v414 = vunpack.c.l.b16 %v340
        %v415 = vunpack.c.h.b16 %v340
        %v416 = vunpack.c.l.b16 %v341
        %v417 = vunpack.c.l.b16 %v342
        %v418 = vunpack.c.h.b16 %v342
        %v419 = vunpack.c.l.b16 %v343
        %v420 = vunpack.c.l.b16 %v344
        %v421 = vunpack.c.h.b16 %v344
        %v422 = vunpack.c.l.b16 %v345
        %v423 = vunpack.c.l.b16 %v346
        %v424 = vunpack.c.h.b16 %v346
        %v425 = vunpack.c.l.b16 %v347
        %v426 = vunpack.c.l.b16 %v348
        %v427 = vunpack.c.h.b16 %v348
        %v428 = vunpack.c.l.b16 %v349
        %v429 = vunpack.c.l.b16 %v350
        %v430 = vunpack.c.h.b16 %v350
        %v431 = vunpack.c.l.b16 %v351
        %v432 = vpack.c.b16 %v387, %v384
        %v433 = vpack.c.b16 %v388, %v385
        %v434 = vpack.c.b16 %v389, %v386
        %v435 = vpack.c.b16 %v393, %v390
        %v436 = vpack.c.b16 %v394, %v391
        %v437 = vpack.c.b16 %v395, %v392
        %v438 = vpack.c.b16 %v399, %v396
        %v439 = vpack.c.b16 %v400, %v397
        %v440 = vpack.c.b16 %v401, %v398
        %v441 = vpack.c.b16 %v405, %v402
        %v442 = vpack.c.b16 %v406, %v403
        %v443 = vpack.c.b16 %v407, %v404
        %v444 = vpack.c.b16 %v411, %v408
        %v445 = vpack.c.b16 %v412, %v409
        %v446 = vpack.c.b16 %v413, %v410
        %v447 = vpack.c.b16 %v417, %v414
        %v448 = vpack.c.b16 %v418, %v415
        %v449 = vpack.c.b16 %v419, %v416
        %v450 = vpack.c.b16 %v423, %v420
        %v451 = vpack.c.b16 %v424, %v421
        %v452 = vpack.c.b16 %v425, %v422
        %v453 = vpack.c.b16 %v429, %v426
        %v454 = vpack.c.b16 %v430, %v427
        %v455 = vpack.c.b16 %v431, %v428
        %480 = vmatpush.bf16.msra.mxu0 %v453
        %481 = vmatpush.bf16.msra.mxu0 %v450
        %482 = vmatpush.bf16.msra.mxu0 %v447
        %483 = vmatpush.bf16.msra.mxu0 %v444
        %484 = vmatpush.bf16.msra.mxu0 %v441
        %485 = vmatpush.bf16.msra.mxu0 %v438
        %486 = vmatpush.bf16.msra.mxu0 %v435
        %487 = vmatpush.bf16.msra.mxu0 %v432
        %488 = vmatmul.bf16.gmra.mxu0 %v312
        %v489 = vpop.f32.mrf.mxu0
        %v490 = vadd.f32 0.0, %v489
        %v491 = vpop.f32.mrf.mxu0
        %v492 = vadd.f32 0.0, %v491
        %493 = vmatmul.bf16.gmra.mxu0 %v313
        %v494 = vpop.f32.mrf.mxu0
        %v495 = vadd.f32 0.0, %v494
        %v496 = vpop.f32.mrf.mxu0
        %v497 = vadd.f32 0.0, %v496
        %498 = vmatmul.bf16.gmra.mxu0 %v314
        %v499 = vpop.f32.mrf.mxu0
        %v500 = vadd.f32 0.0, %v499
        %v501 = vpop.f32.mrf.mxu0
        %v502 = vadd.f32 0.0, %v501
        %503 = vmatmul.bf16.gmra.mxu0 %v315
        %v504 = vpop.f32.mrf.mxu0
        %v505 = vadd.f32 0.0, %v504
        %v506 = vpop.f32.mrf.mxu0
        %v507 = vadd.f32 0.0, %v506
        %508 = vmatmul.bf16.gmra.mxu0 %v316
        %v509 = vpop.f32.mrf.mxu0
        %v510 = vadd.f32 0.0, %v509
        %v511 = vpop.f32.mrf.mxu0
        %v512 = vadd.f32 0.0, %v511
        %513 = vmatmul.bf16.gmra.mxu0 %v317
        %v514 = vpop.f32.mrf.mxu0
        %v515 = vadd.f32 0.0, %v514
        %v516 = vpop.f32.mrf.mxu0
        %v517 = vadd.f32 0.0, %v516
        %518 = vmatmul.bf16.gmra.mxu0 %v318
        %v519 = vpop.f32.mrf.mxu0
        %v520 = vadd.f32 0.0, %v519
        %v521 = vpop.f32.mrf.mxu0
        %v522 = vadd.f32 0.0, %v521
        %523 = vmatmul.bf16.gmra.mxu0 %v319
        %v524 = vpop.f32.mrf.mxu0
        %v525 = vadd.f32 0.0, %v524
        %v526 = vpop.f32.mrf.mxu0
        %v527 = vadd.f32 0.0, %v526
        %528 = vdwg.mxu0
        %529 = vmatpush.bf16.msra.mxu0 %v454
        %530 = vmatpush.bf16.msra.mxu0 %v451
        %531 = vmatpush.bf16.msra.mxu0 %v448
        %532 = vmatpush.bf16.msra.mxu0 %v445
        %533 = vmatpush.bf16.msra.mxu0 %v442
        %534 = vmatpush.bf16.msra.mxu0 %v439
        %535 = vmatpush.bf16.msra.mxu0 %v436
        %536 = vmatpush.bf16.msra.mxu0 %v433
        %537 = vmatmul.bf16.gmra.mxu0 %v312
        %v538 = vpop.f32.mrf.mxu0
        %v539 = vadd.f32 0.0, %v538
        %v540 = vpop.f32.mrf.mxu0
        %v541 = vadd.f32 0.0, %v540
        %542 = vmatmul.bf16.gmra.mxu0 %v313
        %v543 = vpop.f32.mrf.mxu0
        %v544 = vadd.f32 0.0, %v543
        %v545 = vpop.f32.mrf.mxu0
        %v546 = vadd.f32 0.0, %v545
        %547 = vmatmul.bf16.gmra.mxu0 %v314
        %v548 = vpop.f32.mrf.mxu0
        %v549 = vadd.f32 0.0, %v548
        %v550 = vpop.f32.mrf.mxu0
        %v551 = vadd.f32 0.0, %v550
        %552 = vmatmul.bf16.gmra.mxu0 %v315
        %v553 = vpop.f32.mrf.mxu0
        %v554 = vadd.f32 0.0, %v553
        %v555 = vpop.f32.mrf.mxu0
        %v556 = vadd.f32 0.0, %v555
        %557 = vmatmul.bf16.gmra.mxu0 %v316
        %v558 = vpop.f32.mrf.mxu0
        %v559 = vadd.f32 0.0, %v558
        %v560 = vpop.f32.mrf.mxu0
        %v561 = vadd.f32 0.0, %v560
        %562 = vmatmul.bf16.gmra.mxu0 %v317
        %v563 = vpop.f32.mrf.mxu0
        %v564 = vadd.f32 0.0, %v563
        %v565 = vpop.f32.mrf.mxu0
        %v566 = vadd.f32 0.0, %v565
        %567 = vmatmul.bf16.gmra.mxu0 %v318
        %v568 = vpop.f32.mrf.mxu0
        %v569 = vadd.f32 0.0, %v568
        %v570 = vpop.f32.mrf.mxu0
        %v571 = vadd.f32 0.0, %v570
        %572 = vmatmul.bf16.gmra.mxu0 %v319
        %v573 = vpop.f32.mrf.mxu0
        %v574 = vadd.f32 0.0, %v573
        %v575 = vpop.f32.mrf.mxu0
        %v576 = vadd.f32 0.0, %v575
        %577 = vdwg.mxu0
        %578 = vmatpush.bf16.msra.mxu0 %v455
        %579 = vmatpush.bf16.msra.mxu0 %v452
        %580 = vmatpush.bf16.msra.mxu0 %v449
        %581 = vmatpush.bf16.msra.mxu0 %v446
        %582 = vmatpush.bf16.msra.mxu0 %v443
        %583 = vmatpush.bf16.msra.mxu0 %v440
        %584 = vmatpush.bf16.msra.mxu0 %v437
        %585 = vmatpush.bf16.msra.mxu0 %v434
        %586 = vmatmul.bf16.gmra.mxu0 %v312
        %v587 = vpop.f32.mrf.mxu0
        %v588 = vadd.f32 0.0, %v587
        %v589 = vpop.f32.mrf.mxu0
        %v590 = vadd.f32 0.0, %v589
        %591 = vmatmul.bf16.gmra.mxu0 %v313
        %v592 = vpop.f32.mrf.mxu0
        %v593 = vadd.f32 0.0, %v592
        %v594 = vpop.f32.mrf.mxu0
        %v595 = vadd.f32 0.0, %v594
        %596 = vmatmul.bf16.gmra.mxu0 %v314
        %v597 = vpop.f32.mrf.mxu0
        %v598 = vadd.f32 0.0, %v597
        %v599 = vpop.f32.mrf.mxu0
        %v600 = vadd.f32 0.0, %v599
        %601 = vmatmul.bf16.gmra.mxu0 %v315
        %v602 = vpop.f32.mrf.mxu0
        %v603 = vadd.f32 0.0, %v602
        %v604 = vpop.f32.mrf.mxu0
        %v605 = vadd.f32 0.0, %v604
        %606 = vmatmul.bf16.gmra.mxu0 %v316
        %v607 = vpop.f32.mrf.mxu0
        %v608 = vadd.f32 0.0, %v607
        %v609 = vpop.f32.mrf.mxu0
        %v610 = vadd.f32 0.0, %v609
        %611 = vmatmul.bf16.gmra.mxu0 %v317
        %v612 = vpop.f32.mrf.mxu0
        %v613 = vadd.f32 0.0, %v612
        %v614 = vpop.f32.mrf.mxu0
        %v615 = vadd.f32 0.0, %v614
        %616 = vmatmul.bf16.gmra.mxu0 %v318
        %v617 = vpop.f32.mrf.mxu0
        %v618 = vadd.f32 0.0, %v617
        %v619 = vpop.f32.mrf.mxu0
        %v620 = vadd.f32 0.0, %v619
        %621 = vmatmul.bf16.gmra.mxu0 %v319
        %v622 = vpop.f32.mrf.mxu0
        %v623 = vadd.f32 0.0, %v622
        %v624 = vpop.f32.mrf.mxu0
        %v625 = vadd.f32 0.0, %v624
        %626 = vdwg.mxu0
        %v627 = vrot.slane %v539, 1
        %v628 = vrot.slane %v541, 1
        %v629 = vrot.slane %v544, 1
        %v630 = vrot.slane %v546, 1
        %v631 = vrot.slane %v549, 1
        %v632 = vrot.slane %v551, 1
        %v633 = vrot.slane %v554, 1
        %v634 = vrot.slane %v556, 1
        %v635 = vrot.slane %v559, 1
        %v636 = vrot.slane %v561, 1
        %v637 = vrot.slane %v564, 1
        %v638 = vrot.slane %v566, 1
        %v639 = vrot.slane %v569, 1
        %v640 = vrot.slane %v571, 1
        %v641 = vrot.slane %v574, 1
        %v642 = vrot.slane %v576, 1
        %v643 = vlaneseq
        %v644 = vshrl.u32 %v643, 7
        %vm645 = vcmp.lt.s32.totalorder %v644, 7
        %v646 = vsel %vm645, %v641, %v642
        %v647 = vsel %vm645, %v640, %v641
        %v648 = vsel %vm645, %v639, %v640
        %v649 = vsel %vm645, %v638, %v639
        %v650 = vsel %vm645, %v637, %v638
        %v651 = vsel %vm645, %v636, %v637
        %v652 = vsel %vm645, %v635, %v636
        %v653 = vsel %vm645, %v634, %v635
        %v654 = vsel %vm645, %v633, %v634
        %v655 = vsel %vm645, %v632, %v633
        %v656 = vsel %vm645, %v631, %v632
        %v657 = vsel %vm645, %v630, %v631
        %v658 = vsel %vm645, %v629, %v630
        %v659 = vsel %vm645, %v628, %v629
        %v660 = vsel %vm645, %v627, %v628
        %v661 = vsel %vm645, %v642, %v627
        %v662 = vadd.f32 %v490, %v660
        %v663 = vadd.f32 %v492, %v659
        %v664 = vadd.f32 %v495, %v658
        %v665 = vadd.f32 %v497, %v657
        %v666 = vadd.f32 %v500, %v656
        %v667 = vadd.f32 %v502, %v655
        %v668 = vadd.f32 %v505, %v654
        %v669 = vadd.f32 %v507, %v653
        %v670 = vadd.f32 %v510, %v652
        %v671 = vadd.f32 %v512, %v651
        %v672 = vadd.f32 %v515, %v650
        %v673 = vadd.f32 %v517, %v649
        %v674 = vadd.f32 %v520, %v648
        %v675 = vadd.f32 %v522, %v647
        %v676 = vadd.f32 %v525, %v646
        %v677 = vadd.f32 %v527, %v661
        %v678 = vrot.slane %v588, 2
        %v679 = vrot.slane %v590, 2
        %v680 = vrot.slane %v593, 2
        %v681 = vrot.slane %v595, 2
        %v682 = vrot.slane %v598, 2
        %v683 = vrot.slane %v600, 2
        %v684 = vrot.slane %v603, 2
        %v685 = vrot.slane %v605, 2
        %v686 = vrot.slane %v608, 2
        %v687 = vrot.slane %v610, 2
        %v688 = vrot.slane %v613, 2
        %v689 = vrot.slane %v615, 2
        %v690 = vrot.slane %v618, 2
        %v691 = vrot.slane %v620, 2
        %v692 = vrot.slane %v623, 2
        %v693 = vrot.slane %v625, 2
        %vm694 = vcmp.lt.s32.totalorder %v644, 6
        %v695 = vsel %vm694, %v692, %v693
        %v696 = vsel %vm694, %v691, %v692
        %v697 = vsel %vm694, %v690, %v691
        %v698 = vsel %vm694, %v689, %v690
        %v699 = vsel %vm694, %v688, %v689
        %v700 = vsel %vm694, %v687, %v688
        %v701 = vsel %vm694, %v686, %v687
        %v702 = vsel %vm694, %v685, %v686
        %v703 = vsel %vm694, %v684, %v685
        %v704 = vsel %vm694, %v683, %v684
        %v705 = vsel %vm694, %v682, %v683
        %v706 = vsel %vm694, %v681, %v682
        %v707 = vsel %vm694, %v680, %v681
        %v708 = vsel %vm694, %v679, %v680
        %v709 = vsel %vm694, %v678, %v679
        %v710 = vsel %vm694, %v693, %v678
        %v711 = vadd.f32 %v662, %v709
        %v712 = vadd.f32 %v663, %v708
        %v713 = vadd.f32 %v664, %v707
        %v714 = vadd.f32 %v665, %v706
        %v715 = vadd.f32 %v666, %v705
        %v716 = vadd.f32 %v667, %v704
        %v717 = vadd.f32 %v668, %v703
        %v718 = vadd.f32 %v669, %v702
        %v719 = vadd.f32 %v670, %v701
        %v720 = vadd.f32 %v671, %v700
        %v721 = vadd.f32 %v672, %v699
        %v722 = vadd.f32 %v673, %v698
        %v723 = vadd.f32 %v674, %v697
        %v724 = vadd.f32 %v675, %v696
        %v725 = vadd.f32 %v676, %v695
        %v726 = vadd.f32 %v677, %v710
        %v727 = vadd.s32 %v644, 8
        %v728 = vadd.s32 %v644, 16
        %v729 = vadd.s32 %v644, 24
        %v730 = vadd.s32 %v644, 32
        %v731 = vadd.s32 %v644, 40
        %v732 = vadd.s32 %v644, 48
        %v733 = vadd.s32 %v644, 56
        %v734 = vadd.s32 %v644, 64
        %v735 = vadd.s32 %v644, 72
        %v736 = vadd.s32 %v644, 80
        %v737 = vadd.s32 %v644, 88
        %v738 = vadd.s32 %v644, 96
        %v739 = vadd.s32 %v644, 104
        %v740 = vadd.s32 %v644, 112
        %v741 = vadd.s32 %v644, 120
        %vm742 = vcmp.lt.s32.totalorder %v644, 0
        %v743 = vsub.s32 0, %v644
        %v744 = vsel %vm742, %v743, %v644
        %v745 = vshrl.u32 %v744, 4
        %v746 = vand.u32 %v744, 15
        %v747 = vsub.s32 0, %v746
        %v748 = vsel %vm742, %v747, %v746
        %vm749 = vcmp.lt.s32.totalorder %v727, 0
        %v750 = vsub.s32 0, %v727
        %v751 = vsel %vm749, %v750, %v727
        %v752 = vshrl.u32 %v751, 4
        %v753 = vand.u32 %v751, 15
        %v754 = vsub.s32 0, %v753
        %v755 = vsel %vm749, %v754, %v753
        %vm756 = vcmp.lt.s32.totalorder %v728, 0
        %v757 = vsub.s32 0, %v728
        %v758 = vsel %vm756, %v757, %v728
        %v759 = vshrl.u32 %v758, 4
        %v760 = vand.u32 %v758, 15
        %v761 = vsub.s32 0, %v760
        %v762 = vsel %vm756, %v761, %v760
        %vm763 = vcmp.lt.s32.totalorder %v729, 0
        %v764 = vsub.s32 0, %v729
        %v765 = vsel %vm763, %v764, %v729
        %v766 = vshrl.u32 %v765, 4
        %v767 = vand.u32 %v765, 15
        %v768 = vsub.s32 0, %v767
        %v769 = vsel %vm763, %v768, %v767
        %vm770 = vcmp.lt.s32.totalorder %v730, 0
        %v771 = vsub.s32 0, %v730
        %v772 = vsel %vm770, %v771, %v730
        %v773 = vshrl.u32 %v772, 4
        %v774 = vand.u32 %v772, 15
        %v775 = vsub.s32 0, %v774
        %v776 = vsel %vm770, %v775, %v774
        %vm777 = vcmp.lt.s32.totalorder %v731, 0
        %v778 = vsub.s32 0, %v731
        %v779 = vsel %vm777, %v778, %v731
        %v780 = vshrl.u32 %v779, 4
        %v781 = vand.u32 %v779, 15
        %v782 = vsub.s32 0, %v781
        %v783 = vsel %vm777, %v782, %v781
        %vm784 = vcmp.lt.s32.totalorder %v732, 0
        %v785 = vsub.s32 0, %v732
        %v786 = vsel %vm784, %v785, %v732
        %v787 = vshrl.u32 %v786, 4
        %v788 = vand.u32 %v786, 15
        %v789 = vsub.s32 0, %v788
        %v790 = vsel %vm784, %v789, %v788
        %vm791 = vcmp.lt.s32.totalorder %v733, 0
        %v792 = vsub.s32 0, %v733
        %v793 = vsel %vm791, %v792, %v733
        %v794 = vshrl.u32 %v793, 4
        %v795 = vand.u32 %v793, 15
        %v796 = vsub.s32 0, %v795
        %v797 = vsel %vm791, %v796, %v795
        %vm798 = vcmp.lt.s32.totalorder %v734, 0
        %v799 = vsub.s32 0, %v734
        %v800 = vsel %vm798, %v799, %v734
        %v801 = vshrl.u32 %v800, 4
        %v802 = vand.u32 %v800, 15
        %v803 = vsub.s32 0, %v802
        %v804 = vsel %vm798, %v803, %v802
        %vm805 = vcmp.lt.s32.totalorder %v735, 0
        %v806 = vsub.s32 0, %v735
        %v807 = vsel %vm805, %v806, %v735
        %v808 = vshrl.u32 %v807, 4
        %v809 = vand.u32 %v807, 15
        %v810 = vsub.s32 0, %v809
        %v811 = vsel %vm805, %v810, %v809
        %vm812 = vcmp.lt.s32.totalorder %v736, 0
        %v813 = vsub.s32 0, %v736
        %v814 = vsel %vm812, %v813, %v736
        %v815 = vshrl.u32 %v814, 4
        %v816 = vand.u32 %v814, 15
        %v817 = vsub.s32 0, %v816
        %v818 = vsel %vm812, %v817, %v816
        %vm819 = vcmp.lt.s32.totalorder %v737, 0
        %v820 = vsub.s32 0, %v737
        %v821 = vsel %vm819, %v820, %v737
        %v822 = vshrl.u32 %v821, 4
        %v823 = vand.u32 %v821, 15
        %v824 = vsub.s32 0, %v823
        %v825 = vsel %vm819, %v824, %v823
        %vm826 = vcmp.lt.s32.totalorder %v738, 0
        %v827 = vsub.s32 0, %v738
        %v828 = vsel %vm826, %v827, %v738
        %v829 = vshrl.u32 %v828, 4
        %v830 = vand.u32 %v828, 15
        %v831 = vsub.s32 0, %v830
        %v832 = vsel %vm826, %v831, %v830
        %vm833 = vcmp.lt.s32.totalorder %v739, 0
        %v834 = vsub.s32 0, %v739
        %v835 = vsel %vm833, %v834, %v739
        %v836 = vshrl.u32 %v835, 4
        %v837 = vand.u32 %v835, 15
        %v838 = vsub.s32 0, %v837
        %v839 = vsel %vm833, %v838, %v837
        %vm840 = vcmp.lt.s32.totalorder %v740, 0
        %v841 = vsub.s32 0, %v740
        %v842 = vsel %vm840, %v841, %v740
        %v843 = vshrl.u32 %v842, 4
        %v844 = vand.u32 %v842, 15
        %v845 = vsub.s32 0, %v844
        %v846 = vsel %vm840, %v845, %v844
        %vm847 = vcmp.lt.s32.totalorder %v741, 0
        %v848 = vsub.s32 0, %v741
        %v849 = vsel %vm847, %v848, %v741
        %v850 = vshrl.u32 %v849, 4
        %v851 = vand.u32 %v849, 15
        %v852 = vsub.s32 0, %v851
        %v853 = vsel %vm847, %v852, %v851
        %vm854 = vcmp.ne.s32.totalorder %v748, 0
        %vm855 = vcmp.ne.s32.totalorder %v755, 0
        %vm856 = vcmp.ne.s32.totalorder %v762, 0
        %vm857 = vcmp.ne.s32.totalorder %v769, 0
        %vm858 = vcmp.ne.s32.totalorder %v776, 0
        %vm859 = vcmp.ne.s32.totalorder %v783, 0
        %vm860 = vcmp.ne.s32.totalorder %v790, 0
        %vm861 = vcmp.ne.s32.totalorder %v797, 0
        %vm862 = vcmp.ne.s32.totalorder %v804, 0
        %vm863 = vcmp.ne.s32.totalorder %v811, 0
        %vm864 = vcmp.ne.s32.totalorder %v818, 0
        %vm865 = vcmp.ne.s32.totalorder %v825, 0
        %vm866 = vcmp.ne.s32.totalorder %v832, 0
        %vm867 = vcmp.ne.s32.totalorder %v839, 0
        %vm868 = vcmp.ne.s32.totalorder %v846, 0
        %vm869 = vcmp.ne.s32.totalorder %v853, 0
        %vm870 = vcmp.lt.s32.totalorder %v748, 0
        %vm871 = vcmp.lt.s32.totalorder %v755, 0
        %vm872 = vcmp.lt.s32.totalorder %v762, 0
        %vm873 = vcmp.lt.s32.totalorder %v769, 0
        %vm874 = vcmp.lt.s32.totalorder %v776, 0
        %vm875 = vcmp.lt.s32.totalorder %v783, 0
        %vm876 = vcmp.lt.s32.totalorder %v790, 0
        %vm877 = vcmp.lt.s32.totalorder %v797, 0
        %vm878 = vcmp.lt.s32.totalorder %v804, 0
        %vm879 = vcmp.lt.s32.totalorder %v811, 0
        %vm880 = vcmp.lt.s32.totalorder %v818, 0
        %vm881 = vcmp.lt.s32.totalorder %v825, 0
        %vm882 = vcmp.lt.s32.totalorder %v832, 0
        %vm883 = vcmp.lt.s32.totalorder %v839, 0
        %vm884 = vcmp.lt.s32.totalorder %v846, 0
        %vm885 = vcmp.lt.s32.totalorder %v853, 0
        %vm886 = vmand %vm870, %vm854
        %vm887 = vmand %vm871, %vm855
        %vm888 = vmand %vm872, %vm856
        %vm889 = vmand %vm873, %vm857
        %vm890 = vmand %vm874, %vm858
        %vm891 = vmand %vm875, %vm859
        %vm892 = vmand %vm876, %vm860
        %vm893 = vmand %vm877, %vm861
        %vm894 = vmand %vm878, %vm862
        %vm895 = vmand %vm879, %vm863
        %vm896 = vmand %vm880, %vm864
        %vm897 = vmand %vm881, %vm865
        %vm898 = vmand %vm882, %vm866
        %vm899 = vmand %vm883, %vm867
        %vm900 = vmand %vm884, %vm868
        %vm901 = vmand %vm885, %vm869
        %v902 = vadd.s32 %v748, 16
        %v903 = vadd.s32 %v755, 16
        %v904 = vadd.s32 %v762, 16
        %v905 = vadd.s32 %v769, 16
        %v906 = vadd.s32 %v776, 16
        %v907 = vadd.s32 %v783, 16
        %v908 = vadd.s32 %v790, 16
        %v909 = vadd.s32 %v797, 16
        %v910 = vadd.s32 %v804, 16
        %v911 = vadd.s32 %v811, 16
        %v912 = vadd.s32 %v818, 16
        %v913 = vadd.s32 %v825, 16
        %v914 = vadd.s32 %v832, 16
        %v915 = vadd.s32 %v839, 16
        %v916 = vadd.s32 %v846, 16
        %v917 = vadd.s32 %v853, 16
        %v918 = vsel %vm886, %v902, %v748
        %v919 = vsel %vm887, %v903, %v755
        %v920 = vsel %vm888, %v904, %v762
        %v921 = vsel %vm889, %v905, %v769
        %v922 = vsel %vm890, %v906, %v776
        %v923 = vsel %vm891, %v907, %v783
        %v924 = vsel %vm892, %v908, %v790
        %v925 = vsel %vm893, %v909, %v797
        %v926 = vsel %vm894, %v910, %v804
        %v927 = vsel %vm895, %v911, %v811
        %v928 = vsel %vm896, %v912, %v818
        %v929 = vsel %vm897, %v913, %v825
        %v930 = vsel %vm898, %v914, %v832
        %v931 = vsel %vm899, %v915, %v839
        %v932 = vsel %vm900, %v916, %v846
        %v933 = vsel %vm901, %v917, %v853
        %v934 = vld [vmem:[%s2] sm:$0x1]
        %v935 = vperm.slane %v934, 0
        %vm936 = vcmp.lt.s32.totalorder %v918, %v935
        %vm937 = vcmp.lt.s32.totalorder %v919, %v935
        %vm938 = vcmp.lt.s32.totalorder %v920, %v935
        %vm939 = vcmp.lt.s32.totalorder %v921, %v935
        %vm940 = vcmp.lt.s32.totalorder %v922, %v935
        %vm941 = vcmp.lt.s32.totalorder %v923, %v935
        %vm942 = vcmp.lt.s32.totalorder %v924, %v935
        %vm943 = vcmp.lt.s32.totalorder %v925, %v935
        %vm944 = vcmp.lt.s32.totalorder %v926, %v935
        %vm945 = vcmp.lt.s32.totalorder %v927, %v935
        %vm946 = vcmp.lt.s32.totalorder %v928, %v935
        %vm947 = vcmp.lt.s32.totalorder %v929, %v935
        %vm948 = vcmp.lt.s32.totalorder %v930, %v935
        %vm949 = vcmp.lt.s32.totalorder %v931, %v935
        %vm950 = vcmp.lt.s32.totalorder %v932, %v935
        %vm951 = vcmp.lt.s32.totalorder %v933, %v935
        %v952 = vsel %vm936, %v711, -1e+30
        %v953 = vsel %vm937, %v712, -1e+30
        %v954 = vsel %vm938, %v713, -1e+30
        %v955 = vsel %vm939, %v714, -1e+30
        %v956 = vsel %vm940, %v715, -1e+30
        %v957 = vsel %vm941, %v716, -1e+30
        %v958 = vsel %vm942, %v717, -1e+30
        %v959 = vsel %vm943, %v718, -1e+30
        %v960 = vsel %vm944, %v719, -1e+30
        %v961 = vsel %vm945, %v720, -1e+30
        %v962 = vsel %vm946, %v721, -1e+30
        %v963 = vsel %vm947, %v722, -1e+30
        %v964 = vsel %vm948, %v723, -1e+30
        %v965 = vsel %vm949, %v724, -1e+30
        %v966 = vsel %vm950, %v725, -1e+30
        %v967 = vsel %vm951, %v726, -1e+30
        %v968 = vmax.f32 %v952, %v953
        %v969 = vrot.slane %v968, 4
        %v970 = vmax.f32 %v968, %v969
        %v971 = vrot.slane %v970, 2
        %v972 = vmax.f32 %v970, %v971
        %v973 = vrot.slane %v972, 1
        %v974 = vmax.f32 %v972, %v973
        %v975 = vmax.f32 %v954, %v955
        %v976 = vrot.slane %v975, 4
        %v977 = vmax.f32 %v975, %v976
        %v978 = vrot.slane %v977, 2
        %v979 = vmax.f32 %v977, %v978
        %v980 = vrot.slane %v979, 1
        %v981 = vmax.f32 %v979, %v980
        %v982 = vmax.f32 %v956, %v957
        %v983 = vrot.slane %v982, 4
        %v984 = vmax.f32 %v982, %v983
        %v985 = vrot.slane %v984, 2
        %v986 = vmax.f32 %v984, %v985
        %v987 = vrot.slane %v986, 1
        %v988 = vmax.f32 %v986, %v987
        %v989 = vmax.f32 %v958, %v959
        %v990 = vrot.slane %v989, 4
        %v991 = vmax.f32 %v989, %v990
        %v992 = vrot.slane %v991, 2
        %v993 = vmax.f32 %v991, %v992
        %v994 = vrot.slane %v993, 1
        %v995 = vmax.f32 %v993, %v994
        %v996 = vmax.f32 %v960, %v961
        %v997 = vrot.slane %v996, 4
        %v998 = vmax.f32 %v996, %v997
        %v999 = vrot.slane %v998, 2
        %v1000 = vmax.f32 %v998, %v999
        %v1001 = vrot.slane %v1000, 1
        %v1002 = vmax.f32 %v1000, %v1001
        %v1003 = vmax.f32 %v962, %v963
        %v1004 = vrot.slane %v1003, 4
        %v1005 = vmax.f32 %v1003, %v1004
        %v1006 = vrot.slane %v1005, 2
        %v1007 = vmax.f32 %v1005, %v1006
        %v1008 = vrot.slane %v1007, 1
        %v1009 = vmax.f32 %v1007, %v1008
        %v1010 = vmax.f32 %v964, %v965
        %v1011 = vrot.slane %v1010, 4
        %v1012 = vmax.f32 %v1010, %v1011
        %v1013 = vrot.slane %v1012, 2
        %v1014 = vmax.f32 %v1012, %v1013
        %v1015 = vrot.slane %v1014, 1
        %v1016 = vmax.f32 %v1014, %v1015
        %v1017 = vmax.f32 %v966, %v967
        %v1018 = vrot.slane %v1017, 4
        %v1019 = vmax.f32 %v1017, %v1018
        %v1020 = vrot.slane %v1019, 2
        %v1021 = vmax.f32 %v1019, %v1020
        %v1022 = vrot.slane %v1021, 1
        %v1023 = vmax.f32 %v1021, %v1022
        %v1024 = vld [vmem:[%s3] sm:$0x1]
        %v1026 = vperm.slane %v1024, 0
        %v1028 = vadd.f32 %v974, %v1026
        %v1029 = vadd.f32 %v981, %v1026
        %v1030 = vadd.f32 %v988, %v1026
        %v1031 = vadd.f32 %v995, %v1026
        %v1032 = vadd.f32 %v1002, %v1026
        %v1033 = vadd.f32 %v1009, %v1026
        %v1034 = vadd.f32 %v1016, %v1026
        %v1035 = vadd.f32 %v1023, %v1026
        %v1036 = vmax.f32 %v1028, 0.0
        %v1037 = vmax.f32 %v1029, 0.0
        %v1038 = vmax.f32 %v1030, 0.0
        %v1039 = vmax.f32 %v1031, 0.0
        %v1040 = vmax.f32 %v1032, 0.0
        %v1041 = vmax.f32 %v1033, 0.0
        %v1042 = vmax.f32 %v1034, 0.0
        %v1043 = vmax.f32 %v1035, 0.0
        %v1052 = vrot.slane %v1037, 7
        %vm1053 = vcmask 1041409
        %v1054 = vsel %vm1053, %v1052, %v1036
        %v1055 = vrot.slane %v1038, 6
        %vm1056 = vcmask 1042434
        %v1057 = vsel %vm1056, %v1055, %v1054
        %v1058 = vrot.slane %v1039, 5
        %vm1059 = vcmask 1043459
        %v1060 = vsel %vm1059, %v1058, %v1057
        %v1061 = vrot.slane %v1040, 4
        %vm1062 = vcmask 1044484
        %v1063 = vsel %vm1062, %v1061, %v1060
        %v1064 = vrot.slane %v1041, 3
        %vm1065 = vcmask 1045509
        %v1066 = vsel %vm1065, %v1064, %v1063
        %v1067 = vrot.slane %v1042, 2
        %vm1068 = vcmask 1046534
        %v1069 = vsel %vm1068, %v1067, %v1066
        %v1070 = vrot.slane %v1043, 1
        %vm1071 = vcmask 1047559
        %v1072 = vsel %vm1071, %v1070, %v1069
        %1074 = vst [vmem:[%s191] sm:$0xff] %v1072
        %s1075 = sand.u32 %s115, 1
        %s1076 = scalar_lea.sflag [#allocation3], %s1075
        %s1077 = sand.u32 %s115, 1
        %s1078 = smul.addr %s1077, 8
        %s1079 = scalar_lea.vmem [#allocation2], %s1078
        // Predicated region
        $region37: #{tpu_custom_call.1} parent=35 // pred_check
          %p1080 = pneg %p125
        $region38: #{tpu_custom_call.1} parent=35 // pred_check_branch
          %1082 = sbr.rel (%p1080) target = $region40
        $region39: #{tpu_custom_call.1} parent=35 // pred_region
          %1084 = vsyncadd %s1076, 0
          %s1085 = smul.addr %s18, 8
          %s1086 = scalar_lea.hbm %s4, %s1085
          %s1088 = sshll.u32 %s1079, 4
          %s1089 = int_to_ptr.vmem [resolvable:$true] %s1088
          %s1090 = sshll.u32 %s1086, 4
          %s1091 = int_to_ptr.hbm [resolvable:$true] %s1090
          %1093 = dma.vmem_to_hbm [thread:$0]  %s1089, 128, %s1091, %s1076
        $region40: #{tpu_custom_call.1} parent=35 // pred_fallthru
          _
      $region36: #{tpu_custom_call.1} parent=5 // pred_fallthru
        _
      %p1094 = scmp.le.s32.totalorder 2, %s13
      // Predicated region
      $region41: #{tpu_custom_call.1} parent=5 // pred_check
        %p1095 = pneg %p1094
      $region42: #{tpu_custom_call.1} parent=5 // pred_check_branch
        %1097 = sbr.rel (%p1095) target = $region44
      $region43: #{tpu_custom_call.1} parent=5 // pred_region
        %s1098 = ssub.s32 %s13, 2
        // Predicated region
        $region45: #{tpu_custom_call.1} parent=43 // pred_check
          %p1099 = pneg %p131
        $region46: #{tpu_custom_call.1} parent=43 // pred_check_branch
          %1101 = sbr.rel (%p1099) target = $region48
        $region47: #{tpu_custom_call.1} parent=43 // pred_region
          %s1102 = sand.u32 %s116, 1
          %s1103 = scalar_lea.sflag [#allocation3], %s1102
          %s1104 = sand.u32 %s116, 1
          %s1105 = smul.addr %s1104, 8
          %s1106 = scalar_lea.vmem [#allocation2], %s1105
          %1108 = dma.done %s1103, 128
        $region48: #{tpu_custom_call.1} parent=43 // pred_fallthru
          _
      $region44: #{tpu_custom_call.1} parent=5 // pred_fallthru
        _
    $region6: #{tpu_custom_call.1} parent=1 // loop_footer
      %s17 = sadd.s32 1, %s13
    $region7: #{tpu_custom_call.1} parent=1 // loop_footer_branch
      %12 = sbr.rel target = $region3
    $region8: #{tpu_custom_call.1} parent=1 // loop_exit
      _
    %1109 = vsyncpa [#allocation3], 1
    %s1110 = scalar_lea.sflag [#allocation3], 1
    %1111 = vsyncpa %s1110, 1

</llo_original>
